<compile_context>
chip_gen: v6e
topology: v6e:2x2x1
jax: 0.10.0
libtpu: 0.0.40
codegen_flags: <defaults>
</compile_context>

<pallas_src>
import functools

import jax
import jax.numpy as jnp
from jax.experimental import pallas as pl
from jax.experimental.pallas import tpu as pltpu


def _round_up(n: int, m: int) -> int:
    return ((n + m - 1) // m) * m


def _mlp_kernel(xT_ref, w1_ref, b1_ref, w2_ref, b2_ref, w3_ref,
                b3_ref, scale_ref, out_ref):
    D = xT_ref.shape[0]
    w1 = w1_ref[...]                                   # (H, D)  torch orientation
    b1 = b1_ref[...]                                   # (H, 1)  lane-broadcast column

    # fc1 on the VPU: K = D (tiny) -> D broadcast FMAs, MXU stays out of the prologue.
    # ||x||^2 accumulated lane-wise in the same unrolled loop (no sublane reduce).
    x0 = xT_ref[0:1, :]                                # (1, Bt)  batch on lanes
    acc1 = w1[:, 0:1] * x0 + b1                        # (H, Bt)
    ssq = x0 * x0                                      # (1, Bt)
    for j in range(1, D):                              # static unroll, D is tiny (e.g. 3)
        xj = xT_ref[j:j + 1, :]
        acc1 = acc1 + w1[:, j:j + 1] * xj
        ssq = ssq + xj * xj
    h1 = jnp.tanh(acc1)

    # fc2 + tanh on the MXU: (H, H) @ (H, Bt) -> (H, Bt)
    h2 = jnp.tanh(
        jnp.dot(w2_ref[...], h1, preferred_element_type=jnp.float32) + b2_ref[...])

    # fc3: (1, H) @ (H, Bt) -> (1, Bt)
    o = jnp.dot(w3_ref[...], h2, preferred_element_type=jnp.float32) + b3_ref[0]

    # ||x||_2 ** o == exp(o * 0.5 * log(sum(x^2)))   (sqrt-free; EUP exp/log only)
    powed = jnp.exp(o * 0.5 * jnp.log(ssq))
    # guard ||x|| == 0 to match torch's 0 ** o semantics (0 / 1 / inf)
    zero_pow = jnp.where(o > 0, 0.0, jnp.where(o == 0, 1.0, jnp.inf))
    powed = jnp.where(ssq > 0, powed, zero_pow)

    # scaling: Linear(1, 1, bias=False)
    out_ref[...] = powed * scale_ref[0]                # (1, Bt) lane-dense store


@functools.partial(jax.jit, static_argnames=("block_b",))
def neural_net_forward(x, params, *, block_b=2048):
    """x: (B, D) float32.  params: torch-orientation weights (see init_params).

    Transpose/pad/slice around the pallas_call are under the same jit so XLA fuses
    them; the whole batch runs in one grid step whenever round_up(B,128) <= block_b.
    """
    B, D = x.shape
    H = params["w1"].shape[0]

    Bp128 = _round_up(B, 128)
    if Bp128 <= block_b:
        bb = Bp128                                  # single grid step: no per-step overhead
    else:
        bb = max(128, (block_b // 128) * 128)       # only tile genuinely large batches
    Bp = _round_up(B, bb)
    grid = (Bp // bb,)

    xT = jnp.transpose(x)                                              # (D, B)
    if Bp != B:
        # pad columns with 1.0 so the (discarded) padded lanes have norm > 0 -> finite math
        xT = jnp.pad(xT, ((0, 0), (0, Bp - B)), constant_values=1.0)

    full = lambda a: pl.BlockSpec(a.shape, lambda i: (0,) * a.ndim)    # whole-array VMEM block
    smem = pl.BlockSpec(memory_space=pltpu.MemorySpace.SMEM)           # scalar in SMEM

    weight_bytes = 4 * (H * D + H + H * H + H + H + 1 + 1)
    cost = pl.CostEstimate(
        flops=2 * (H * D + H * H + H) * Bp,
        transcendentals=(2 * H + 2) * Bp,            # 2 tanh layers + exp + log per column
        bytes_accessed=4 * (D * Bp + Bp) + weight_bytes,
    )

    out = pl.pallas_call(
        _mlp_kernel,
        out_shape=jax.ShapeDtypeStruct((1, Bp), jnp.float32),
        grid=grid,
        in_specs=[
            pl.BlockSpec((D, bb), lambda i: (0, i)),   # x^T tile, batch on lanes
            full(params["w1"]), full(params["b1"]),    # fc1
            full(params["w2"]), full(params["b2"]),    # fc2
            full(params["w3"]),                        # fc3 weight
            smem,                                      # fc3 bias (scalar)
            smem,                                      # scaling weight (scalar)
        ],
        out_specs=pl.BlockSpec((1, bb), lambda i: (0, i)),
        # Grid is normally a single step; steps are sequential on v5e/v6e anyway, so we
        # don't rely on string semantics for megacore sharding (use CORE_PARALLEL /
        # core_map only if batches get large enough to be worth the second v7x TC).
        compiler_params=pltpu.CompilerParams(dimension_semantics=("arbitrary",)),
        cost_estimate=cost,
    )(
        xT,
        params["w1"], params["b1"],
        params["w2"], params["b2"],
        params["w3"], params["b3"],
        params["scale"],
    )
    return out[0, :B][:, None]                                         # (B, 1)


def init_params(key, input_size, hidden_size):
    """Deterministic init mimicking torch.nn.Linear's U(-1/sqrt(fan_in), 1/sqrt(fan_in))."""
    ks = jax.random.split(key, 7)

    def uni(k, shape, fan_in):
        bound = 1.0 / jnp.sqrt(jnp.float32(fan_in))
        return jax.random.uniform(k, shape, jnp.float32, -bound, bound)

    D, H = input_size, hidden_size
    return {
        "w1": uni(ks[0], (H, D), D),       # fc1.weight  (torch orientation)
        "b1": uni(ks[1], (H, 1), D),       # fc1.bias    (column vector: lane broadcast)
        "w2": uni(ks[2], (H, H), H),       # fc2.weight
        "b2": uni(ks[3], (H, 1), H),       # fc2.bias
        "w3": uni(ks[4], (1, H), H),       # fc3.weight
        "b3": uni(ks[5], (1,), H),         # fc3.bias    (SMEM scalar)
        "scale": uni(ks[6], (1,), 1),      # scaling.weight (no bias)
    }


def reference_forward(x, p):
    h1 = jnp.tanh(x @ p["w1"].T + p["b1"][:, 0])
    h2 = jnp.tanh(h1 @ p["w2"].T + p["b2"][:, 0])
    o = h2 @ p["w3"].T + p["b3"]
    nrm = jnp.linalg.norm(x, axis=-1, keepdims=True)
    return (nrm ** o) * p["scale"]


if __name__ == "__main__":
    key = jax.random.PRNGKey(0)
    k_x, k_p = jax.random.split(key)

    batch, input_size, hidden = 512, 3, 32   # e.g. wave-vector input k = (k1, k2, k3)
    x = jax.random.normal(k_x, (batch, input_size), jnp.float32)
    params = init_params(k_p, input_size, hidden)

    # Default block_b (2048) -> whole batch in a single grid step on every TPU generation.
    out = neural_net_forward(x, params)
    out = jax.block_until_ready(out)

    ref = reference_forward(x, params)
    assert out.shape == (batch, 1)
    assert jnp.allclose(out, ref, rtol=1e-3, atol=1e-5), "mismatch vs reference"

    print("KERNEL_OK")
</pallas_src>

<mosaic_0001>
module attributes {stable_mosaic.version = 11 : i64} {
  func.func @_mlp_kernel(%arg0: i32, %arg1: memref<3x512xf32, #tpu.memory_space<vmem>>, %arg2: memref<32x3xf32, #tpu.memory_space<vmem>>, %arg3: memref<32x1xf32, #tpu.memory_space<vmem>>, %arg4: memref<32x32xf32, #tpu.memory_space<vmem>>, %arg5: memref<32x1xf32, #tpu.memory_space<vmem>>, %arg6: memref<1x32xf32, #tpu.memory_space<vmem>>, %arg7: memref<1xf32, #tpu.memory_space<smem>>, %arg8: memref<1xf32, #tpu.memory_space<smem>>, %arg9: memref<1x512xf32, #tpu.memory_space<vmem>>) attributes {dimension_semantics = [#tpu.dimension_semantics<arbitrary>], iteration_bounds = array<i64: 1>, scalar_prefetch = 0 : i64, scratch_operands = 0 : i64, tpu.core_type = #tpu.core_type<tc>, window_params = [{transform_indices = @transform_0, window_bounds = array<i64: 3, 512>}, {pipeline_mode = #tpu.pipeline_mode<synchronous>, transform_indices = @transform_1, window_bounds = array<i64: 32, 3>}, {pipeline_mode = #tpu.pipeline_mode<synchronous>, transform_indices = @transform_2, window_bounds = array<i64: 32, 1>}, {pipeline_mode = #tpu.pipeline_mode<synchronous>, transform_indices = @transform_3, window_bounds = array<i64: 32, 32>}, {pipeline_mode = #tpu.pipeline_mode<synchronous>, transform_indices = @transform_4, window_bounds = array<i64: 32, 1>}, {pipeline_mode = #tpu.pipeline_mode<synchronous>, transform_indices = @transform_5, window_bounds = array<i64: 1, 32>}, {transform_indices = @transform_6, window_bounds = array<i64: 1>}, {transform_indices = @transform_7, window_bounds = array<i64: 1>}, {transform_indices = @transform_8, window_bounds = array<i64: 1, 512>}]} {
    %c0 = arith.constant 0 : index
    %c0_0 = arith.constant 0 : index
    %0 = vector.load %arg2[%c0, %c0_0] : memref<32x3xf32, #tpu.memory_space<vmem>>, vector<32x3xf32>
    %c0_1 = arith.constant 0 : index
    %c0_2 = arith.constant 0 : index
    %1 = vector.load %arg3[%c0_1, %c0_2] : memref<32x1xf32, #tpu.memory_space<vmem>>, vector<32x1xf32>
    %c0_3 = arith.constant 0 : index
    %c0_4 = arith.constant 0 : index
    %2 = vector.load %arg1[%c0_3, %c0_4] : memref<3x512xf32, #tpu.memory_space<vmem>>, vector<1x512xf32>
    %3 = vector.extract_strided_slice %0 {offsets = [0, 0], sizes = [32, 1], strides = [1, 1]} : vector<32x3xf32> to vector<32x1xf32>
    %4 = vector.broadcast %3 : vector<32x1xf32> to vector<32x512xf32>
    %5 = vector.broadcast %2 : vector<1x512xf32> to vector<32x512xf32>
    %6 = arith.mulf %4, %5 : vector<32x512xf32>
    %7 = vector.broadcast %1 : vector<32x1xf32> to vector<32x512xf32>
    %8 = arith.addf %6, %7 : vector<32x512xf32>
    %9 = arith.mulf %2, %2 : vector<1x512xf32>
    %c1 = arith.constant 1 : index
    %c0_5 = arith.constant 0 : index
    %10 = vector.load %arg1[%c1, %c0_5] : memref<3x512xf32, #tpu.memory_space<vmem>>, vector<1x512xf32>
    %11 = vector.extract_strided_slice %0 {offsets = [0, 1], sizes = [32, 1], strides = [1, 1]} : vector<32x3xf32> to vector<32x1xf32>
    %12 = vector.broadcast %11 : vector<32x1xf32> to vector<32x512xf32>
    %13 = vector.broadcast %10 : vector<1x512xf32> to vector<32x512xf32>
    %14 = arith.mulf %12, %13 : vector<32x512xf32>
    %15 = arith.addf %8, %14 : vector<32x512xf32>
    %16 = arith.mulf %10, %10 : vector<1x512xf32>
    %17 = arith.addf %9, %16 : vector<1x512xf32>
    %c2 = arith.constant 2 : index
    %c0_6 = arith.constant 0 : index
    %18 = vector.load %arg1[%c2, %c0_6] : memref<3x512xf32, #tpu.memory_space<vmem>>, vector<1x512xf32>
    %19 = vector.extract_strided_slice %0 {offsets = [0, 2], sizes = [32, 1], strides = [1, 1]} : vector<32x3xf32> to vector<32x1xf32>
    %20 = vector.broadcast %19 : vector<32x1xf32> to vector<32x512xf32>
    %21 = vector.broadcast %18 : vector<1x512xf32> to vector<32x512xf32>
    %22 = arith.mulf %20, %21 : vector<32x512xf32>
    %23 = arith.addf %15, %22 : vector<32x512xf32>
    %24 = arith.mulf %18, %18 : vector<1x512xf32>
    %25 = arith.addf %17, %24 : vector<1x512xf32>
    %26 = math.tanh %23 : vector<32x512xf32>
    %c0_7 = arith.constant 0 : index
    %c0_8 = arith.constant 0 : index
    %27 = vector.load %arg4[%c0_7, %c0_8] : memref<32x32xf32, #tpu.memory_space<vmem>>, vector<32x32xf32>
    %cst = arith.constant dense<0.000000e+00> : vector<32x512xf32>
    %28 = tpu.matmul %27, %26, %cst {dimension_numbers = #tpu.dot_dimension_numbers<[1], [0], [0], [1], [0, 0, 1, 1], [], []>} : vector<32x32xf32>, vector<32x512xf32>, vector<32x512xf32> -> vector<32x512xf32>
    %c0_9 = arith.constant 0 : index
    %c0_10 = arith.constant 0 : index
    %29 = vector.load %arg5[%c0_9, %c0_10] : memref<32x1xf32, #tpu.memory_space<vmem>>, vector<32x1xf32>
    %30 = vector.broadcast %29 : vector<32x1xf32> to vector<32x512xf32>
    %31 = arith.addf %28, %30 : vector<32x512xf32>
    %32 = math.tanh %31 : vector<32x512xf32>
    %c0_11 = arith.constant 0 : index
    %c0_12 = arith.constant 0 : index
    %33 = vector.load %arg6[%c0_11, %c0_12] : memref<1x32xf32, #tpu.memory_space<vmem>>, vector<1x32xf32>
    %cst_13 = arith.constant dense<0.000000e+00> : vector<1x512xf32>
    %34 = tpu.matmul %33, %32, %cst_13 {dimension_numbers = #tpu.dot_dimension_numbers<[1], [0], [0], [1], [0, 0, 1, 1], [], []>} : vector<1x32xf32>, vector<32x512xf32>, vector<1x512xf32> -> vector<1x512xf32>
    %c0_14 = arith.constant 0 : index
    %35 = memref.load %arg7[%c0_14] : memref<1xf32, #tpu.memory_space<smem>>
    %36 = vector.broadcast %35 : f32 to vector<1x512xf32>
    %37 = arith.addf %34, %36 : vector<1x512xf32>
    %cst_15 = arith.constant 5.000000e-01 : f32
    %38 = vector.broadcast %cst_15 : f32 to vector<1x512xf32>
    %39 = arith.mulf %37, %38 : vector<1x512xf32>
    %40 = math.log %25 : vector<1x512xf32>
    %41 = arith.mulf %39, %40 : vector<1x512xf32>
    %42 = math.exp %41 : vector<1x512xf32>
    %cst_16 = arith.constant 0.000000e+00 : f32
    %43 = vector.broadcast %cst_16 : f32 to vector<1x512xf32>
    %44 = arith.cmpf ogt, %37, %43 : vector<1x512xf32>
    %cst_17 = arith.constant 0.000000e+00 : f32
    %45 = vector.broadcast %cst_17 : f32 to vector<1x512xf32>
    %46 = arith.cmpf oeq, %37, %45 : vector<1x512xf32>
    %cst_18 = arith.constant 1.000000e+00 : f32
    %cst_19 = arith.constant 0x7F800000 : f32
    %47 = vector.broadcast %cst_18 : f32 to vector<1x512xf32>
    %48 = vector.broadcast %cst_19 : f32 to vector<1x512xf32>
    %49 = arith.select %46, %47, %48 : vector<1x512xi1>, vector<1x512xf32>
    %cst_20 = arith.constant 0.000000e+00 : f32
    %50 = vector.broadcast %cst_20 : f32 to vector<1x512xf32>
    %51 = arith.select %44, %50, %49 : vector<1x512xi1>, vector<1x512xf32>
    %cst_21 = arith.constant 0.000000e+00 : f32
    %52 = vector.broadcast %cst_21 : f32 to vector<1x512xf32>
    %53 = arith.cmpf ogt, %25, %52 : vector<1x512xf32>
    %54 = arith.select %53, %42, %51 : vector<1x512xi1>, vector<1x512xf32>
    %c0_22 = arith.constant 0 : index
    %55 = memref.load %arg8[%c0_22] : memref<1xf32, #tpu.memory_space<smem>>
    %56 = vector.broadcast %55 : f32 to vector<1x512xf32>
    %57 = arith.mulf %54, %56 : vector<1x512xf32>
    %c0_23 = arith.constant 0 : index
    %c0_24 = arith.constant 0 : index
    %58 = vector.load %arg9[%c0_23, %c0_24] : memref<1x512xf32, #tpu.memory_space<vmem>>, vector<1x512xf32>
    tpu.vector_store %arg9[%c0_23, %c0_24], %57 {strides = array<i32>} : memref<1x512xf32, #tpu.memory_space<vmem>>, vector<1x512xf32>,
    return
  }
  func.func @transform_0(%arg0: i32) -> (i32, i32) {
    %c0_i32 = arith.constant 0 : i32
    %c0_i32_0 = arith.constant 0 : i32
    return %c0_i32, %arg0 : i32, i32
  }
  func.func @transform_1(%arg0: i32) -> (i32, i32) {
    %c0_i32 = arith.constant 0 : i32
    %c0_i32_0 = arith.constant 0 : i32
    %c0_i32_1 = arith.constant 0 : i32
    return %c0_i32, %c0_i32_0 : i32, i32
  }
  func.func @transform_2(%arg0: i32) -> (i32, i32) {
    %c0_i32 = arith.constant 0 : i32
    %c0_i32_0 = arith.constant 0 : i32
    %c0_i32_1 = arith.constant 0 : i32
    return %c0_i32, %c0_i32_0 : i32, i32
  }
  func.func @transform_3(%arg0: i32) -> (i32, i32) {
    %c0_i32 = arith.constant 0 : i32
    %c0_i32_0 = arith.constant 0 : i32
    %c0_i32_1 = arith.constant 0 : i32
    return %c0_i32, %c0_i32_0 : i32, i32
  }
  func.func @transform_4(%arg0: i32) -> (i32, i32) {
    %c0_i32 = arith.constant 0 : i32
    %c0_i32_0 = arith.constant 0 : i32
    %c0_i32_1 = arith.constant 0 : i32
    return %c0_i32, %c0_i32_0 : i32, i32
  }
  func.func @transform_5(%arg0: i32) -> (i32, i32) {
    %c0_i32 = arith.constant 0 : i32
    %c0_i32_0 = arith.constant 0 : i32
    %c0_i32_1 = arith.constant 0 : i32
    return %c0_i32, %c0_i32_0 : i32, i32
  }
  func.func @transform_6(%arg0: i32) -> i32 {
    %c0_i32 = arith.constant 0 : i32
    %c0_i32_0 = arith.constant 0 : i32
    return %c0_i32 : i32
  }
  func.func @transform_7(%arg0: i32) -> i32 {
    %c0_i32 = arith.constant 0 : i32
    %c0_i32_0 = arith.constant 0 : i32
    return %c0_i32 : i32
  }
  func.func @transform_8(%arg0: i32) -> (i32, i32) {
    %c0_i32 = arith.constant 0 : i32
    %c0_i32_0 = arith.constant 0 : i32
    return %c0_i32, %arg0 : i32, i32
  }
}

</mosaic_0001>

<llo_original>
// kernel: neural_net_forward.1
$region0: #{neural_net_forward.1}
  #allocation0 [shape = 'u32[]', space=smem, size = 0x4, offset = 0x4, fixed_abs, tag = 'smem constant byte address 0x4 - core index']
  #allocation1 [shape = 'u32[144,128]{1,0:T(1,128)}', space=vmem, size = 0x12000, scoped, tag = 'internal scratch']
  #allocation2 [shape = 'f32[1]{0:T(128)S(6)}', space=smem, size = 0x200, scoped, tag = 'scoped memory for neural_net_forward.1']
  #allocation3 [shape = 'f32[1]{0:T(128)S(6)}', space=smem, size = 0x200, scoped, tag = 'scoped memory for neural_net_forward.1']
  %s0 = inlined_call_operand.vmem [shape: f32[3,512], index: 0, kind: input, shape index: {}]
  %s1 = inlined_call_operand.vmem [shape: f32[32,3], index: 1, kind: input, shape index: {}]
  %s2 = inlined_call_operand.vmem [shape: f32[32,1], index: 2, kind: input, shape index: {}]
  %s3 = inlined_call_operand.vmem [shape: f32[32,32], index: 3, kind: input, shape index: {}]
  %s4 = inlined_call_operand.vmem [shape: f32[32,1], index: 4, kind: input, shape index: {}]
  %s5 = inlined_call_operand.vmem [shape: f32[1,32], index: 5, kind: input, shape index: {}]
  %s6 = inlined_call_operand.<no memory space> [shape: f32[1], index: 6, kind: input, shape index: {}]
  %s7 = inlined_call_operand.<no memory space> [shape: f32[1], index: 7, kind: input, shape index: {}]
  %s8 = inlined_call_operand.hbm [shape: f32[1,512], index: 8, kind: output, shape index: {}]
  %s9 = sld [smem:[#allocation0]]
  $region42: #{neural_net_forward.1} parent=0
    _
  %s11 = ssub.s32 1, %s9
  %s12 = scalar_select 0, %s11, %s9
  %13 = sst [smem:[#allocation2]] %s6
  %14 = sst [smem:[#allocation3]] %s7
  $region1: #{neural_net_forward.1} parent=0
    #allocation4 [shape = 'u8[2048]{0}', space=vmem, size = 0x800, scoped, tag = 'output window, operand 0, single buffered']
    #allocation5 [shape = 's32[1]{0}', space=sflag, size = 0x4, scoped, tag = 'scoped memory for neural_net_forward.1']
    %15 = vsyncpa [#allocation5], 0
    // Predicated region
    $region2: #{neural_net_forward.1} parent=1 // pred_check
      _
    $region3: #{neural_net_forward.1} parent=1 // pred_check_branch
      %17 = sbr.rel (0) target = $region5
    $region4: #{neural_net_forward.1} parent=1 // pred_region
      _
    $region5: #{neural_net_forward.1} parent=1 // pred_fallthru
      _
    // Predicated region
    $region6: #{neural_net_forward.1} parent=1 // pred_check
      _
    $region7: #{neural_net_forward.1} parent=1 // pred_check_branch
      %19 = sbr.rel (0) target = $region9
    $region8: #{neural_net_forward.1} parent=1 // pred_region
      _
    $region9: #{neural_net_forward.1} parent=1 // pred_fallthru
      _
    // Predicated region
    $region10: #{neural_net_forward.1} parent=1 // pred_check
      _
    $region11: #{neural_net_forward.1} parent=1 // pred_check_branch
      %21 = sbr.rel (0) target = $region13
    $region12: #{neural_net_forward.1} parent=1 // pred_region
      _
    $region13: #{neural_net_forward.1} parent=1 // pred_fallthru
      _
    // Predicated region
    $region14: #{neural_net_forward.1} parent=1 // pred_check
      _
    $region15: #{neural_net_forward.1} parent=1 // pred_check_branch
      %23 = sbr.rel (0) target = $region17
    $region16: #{neural_net_forward.1} parent=1 // pred_region
      _
    $region17: #{neural_net_forward.1} parent=1 // pred_fallthru
      _
    // Predicated region
    $region18: #{neural_net_forward.1} parent=1 // pred_check
      _
    $region19: #{neural_net_forward.1} parent=1 // pred_check_branch
      %25 = sbr.rel (0) target = $region21
    $region20: #{neural_net_forward.1} parent=1 // pred_region
      _
    $region21: #{neural_net_forward.1} parent=1 // pred_fallthru
      _
    // Predicated region
    $region22: #{neural_net_forward.1} parent=1 // pred_check
      _
    $region23: #{neural_net_forward.1} parent=1 // pred_check_branch
      %27 = sbr.rel (0) target = $region25
    $region24: #{neural_net_forward.1} parent=1 // pred_region
      _
    $region25: #{neural_net_forward.1} parent=1 // pred_fallthru
      _
    // Predicated region
    $region26: #{neural_net_forward.1} parent=1 // pred_check
      _
    $region27: #{neural_net_forward.1} parent=1 // pred_check_branch
      %29 = sbr.rel (0) target = $region29
    $region28: #{neural_net_forward.1} parent=1 // pred_region
      _
    $region29: #{neural_net_forward.1} parent=1 // pred_fallthru
      _
    // Predicated region
    $region30: #{neural_net_forward.1} parent=1 // pred_check
      _
    $region31: #{neural_net_forward.1} parent=1 // pred_check_branch
      %31 = sbr.rel (0) target = $region33
    $region32: #{neural_net_forward.1} parent=1 // pred_region
      _
    $region33: #{neural_net_forward.1} parent=1 // pred_fallthru
      _
    %v32 = vld [vmem:[%s1] sm:$0xff]
    %v33 = vld [vmem:[%s1 + $0x8] sm:$0xff]
    %v34 = vld [vmem:[%s1 + $0x10] sm:$0xff]
    %v35 = vld [vmem:[%s1 + $0x18] sm:$0xff]
    %v36 = vld [vmem:[%s2] sm:$0xff]
    %v37 = vld [vmem:[%s2 + $0x8] sm:$0xff]
    %v38 = vld [vmem:[%s2 + $0x10] sm:$0xff]
    %v39 = vld [vmem:[%s2 + $0x18] sm:$0xff]
    %v40 = vld [vmem:[%s0] ss:$4 sm:$0xf]
    %42 = vset.pattern.permute.xlu0 0
    %43 = vperm.xlu0 %42, %v32
    %v44 = vpop.permute.xlu0 %43
    %47 = vset.pattern.permute.xlu0 0
    %48 = vperm.xlu0 %47, %v33
    %v49 = vpop.permute.xlu0 %48
    %52 = vset.pattern.permute.xlu0 0
    %53 = vperm.xlu0 %52, %v34
    %v54 = vpop.permute.xlu0 %53
    %57 = vset.pattern.permute.xlu0 0
    %58 = vperm.xlu0 %57, %v35
    %v59 = vpop.permute.xlu0 %58
    %v62 = vlaneseq
    %v63 = vshrl.u32 %v62, 7
    %v64 = vsub.s32 0, %v63
    %v65 = vrot.slane %v40, %v64
    %v66 = vlaneseq
    %v67 = vshrl.u32 %v66, 7
    %v68 = vsub.s32 1, %v67
    %v69 = vrot.slane %v40, %v68
    %v70 = vlaneseq
    %v71 = vshrl.u32 %v70, 7
    %v72 = vsub.s32 2, %v71
    %v73 = vrot.slane %v40, %v72
    %v74 = vlaneseq
    %v75 = vshrl.u32 %v74, 7
    %v76 = vsub.s32 3, %v75
    %v77 = vrot.slane %v40, %v76
    %v82 = vmul.f32 %v44, %v65
    %v83 = vmul.f32 %v44, %v69
    %v84 = vmul.f32 %v44, %v73
    %v85 = vmul.f32 %v44, %v77
    %v86 = vmul.f32 %v49, %v65
    %v87 = vmul.f32 %v49, %v69
    %v88 = vmul.f32 %v49, %v73
    %v89 = vmul.f32 %v49, %v77
    %v90 = vmul.f32 %v54, %v65
    %v91 = vmul.f32 %v54, %v69
    %v92 = vmul.f32 %v54, %v73
    %v93 = vmul.f32 %v54, %v77
    %v94 = vmul.f32 %v59, %v65
    %v95 = vmul.f32 %v59, %v69
    %v96 = vmul.f32 %v59, %v73
    %v97 = vmul.f32 %v59, %v77
    %99 = vset.pattern.permute.xlu0 0
    %100 = vperm.xlu0 %99, %v36
    %v101 = vpop.permute.xlu0 %100
    %104 = vset.pattern.permute.xlu0 0
    %105 = vperm.xlu0 %104, %v37
    %v106 = vpop.permute.xlu0 %105
    %109 = vset.pattern.permute.xlu0 0
    %110 = vperm.xlu0 %109, %v38
    %v111 = vpop.permute.xlu0 %110
    %114 = vset.pattern.permute.xlu0 0
    %115 = vperm.xlu0 %114, %v39
    %v116 = vpop.permute.xlu0 %115
    %v118 = vadd.f32 %v82, %v101
    %v119 = vadd.f32 %v83, %v101
    %v120 = vadd.f32 %v84, %v101
    %v121 = vadd.f32 %v85, %v101
    %v122 = vadd.f32 %v86, %v106
    %v123 = vadd.f32 %v87, %v106
    %v124 = vadd.f32 %v88, %v106
    %v125 = vadd.f32 %v89, %v106
    %v126 = vadd.f32 %v90, %v111
    %v127 = vadd.f32 %v91, %v111
    %v128 = vadd.f32 %v92, %v111
    %v129 = vadd.f32 %v93, %v111
    %v130 = vadd.f32 %v94, %v116
    %v131 = vadd.f32 %v95, %v116
    %v132 = vadd.f32 %v96, %v116
    %v133 = vadd.f32 %v97, %v116
    %v134 = vmul.f32 %v40, %v40
    %s135 = scalar_lea.vmem %s0, 1
    %v136 = vld [vmem:[%s135] ss:$4 sm:$0xf]
    %137 = vset.pattern.permute.xlu0 1
    %138 = vperm.xlu0 %137, %v32
    %v139 = vpop.permute.xlu0 %138
    %141 = vset.pattern.permute.xlu0 1
    %142 = vperm.xlu0 %141, %v33
    %v143 = vpop.permute.xlu0 %142
    %145 = vset.pattern.permute.xlu0 1
    %146 = vperm.xlu0 %145, %v34
    %v147 = vpop.permute.xlu0 %146
    %149 = vset.pattern.permute.xlu0 1
    %150 = vperm.xlu0 %149, %v35
    %v151 = vpop.permute.xlu0 %150
    %v154 = vlaneseq
    %v155 = vshrl.u32 %v154, 7
    %v156 = vsub.s32 0, %v155
    %v157 = vrot.slane %v136, %v156
    %v158 = vlaneseq
    %v159 = vshrl.u32 %v158, 7
    %v160 = vsub.s32 1, %v159
    %v161 = vrot.slane %v136, %v160
    %v162 = vlaneseq
    %v163 = vshrl.u32 %v162, 7
    %v164 = vsub.s32 2, %v163
    %v165 = vrot.slane %v136, %v164
    %v166 = vlaneseq
    %v167 = vshrl.u32 %v166, 7
    %v168 = vsub.s32 3, %v167
    %v169 = vrot.slane %v136, %v168
    %v174 = vmul.f32 %v139, %v157
    %v175 = vmul.f32 %v139, %v161
    %v176 = vmul.f32 %v139, %v165
    %v177 = vmul.f32 %v139, %v169
    %v178 = vmul.f32 %v143, %v157
    %v179 = vmul.f32 %v143, %v161
    %v180 = vmul.f32 %v143, %v165
    %v181 = vmul.f32 %v143, %v169
    %v182 = vmul.f32 %v147, %v157
    %v183 = vmul.f32 %v147, %v161
    %v184 = vmul.f32 %v147, %v165
    %v185 = vmul.f32 %v147, %v169
    %v186 = vmul.f32 %v151, %v157
    %v187 = vmul.f32 %v151, %v161
    %v188 = vmul.f32 %v151, %v165
    %v189 = vmul.f32 %v151, %v169
    %v190 = vadd.f32 %v118, %v174
    %v191 = vadd.f32 %v119, %v175
    %v192 = vadd.f32 %v120, %v176
    %v193 = vadd.f32 %v121, %v177
    %v194 = vadd.f32 %v122, %v178
    %v195 = vadd.f32 %v123, %v179
    %v196 = vadd.f32 %v124, %v180
    %v197 = vadd.f32 %v125, %v181
    %v198 = vadd.f32 %v126, %v182
    %v199 = vadd.f32 %v127, %v183
    %v200 = vadd.f32 %v128, %v184
    %v201 = vadd.f32 %v129, %v185
    %v202 = vadd.f32 %v130, %v186
    %v203 = vadd.f32 %v131, %v187
    %v204 = vadd.f32 %v132, %v188
    %v205 = vadd.f32 %v133, %v189
    %v206 = vmul.f32 %v136, %v136
    %v207 = vadd.f32 %v134, %v206
    %s208 = scalar_lea.vmem %s0, 2
    %v209 = vld [vmem:[%s208] ss:$4 sm:$0xf]
    %210 = vset.pattern.permute.xlu0 2
    %211 = vperm.xlu0 %210, %v32
    %v212 = vpop.permute.xlu0 %211
    %214 = vset.pattern.permute.xlu0 2
    %215 = vperm.xlu0 %214, %v33
    %v216 = vpop.permute.xlu0 %215
    %218 = vset.pattern.permute.xlu0 2
    %219 = vperm.xlu0 %218, %v34
    %v220 = vpop.permute.xlu0 %219
    %222 = vset.pattern.permute.xlu0 2
    %223 = vperm.xlu0 %222, %v35
    %v224 = vpop.permute.xlu0 %223
    %v227 = vlaneseq
    %v228 = vshrl.u32 %v227, 7
    %v229 = vsub.s32 0, %v228
    %v230 = vrot.slane %v209, %v229
    %v231 = vlaneseq
    %v232 = vshrl.u32 %v231, 7
    %v233 = vsub.s32 1, %v232
    %v234 = vrot.slane %v209, %v233
    %v235 = vlaneseq
    %v236 = vshrl.u32 %v235, 7
    %v237 = vsub.s32 2, %v236
    %v238 = vrot.slane %v209, %v237
    %v239 = vlaneseq
    %v240 = vshrl.u32 %v239, 7
    %v241 = vsub.s32 3, %v240
    %v242 = vrot.slane %v209, %v241
    %v247 = vmul.f32 %v212, %v230
    %v248 = vmul.f32 %v212, %v234
    %v249 = vmul.f32 %v212, %v238
    %v250 = vmul.f32 %v212, %v242
    %v251 = vmul.f32 %v216, %v230
    %v252 = vmul.f32 %v216, %v234
    %v253 = vmul.f32 %v216, %v238
    %v254 = vmul.f32 %v216, %v242
    %v255 = vmul.f32 %v220, %v230
    %v256 = vmul.f32 %v220, %v234
    %v257 = vmul.f32 %v220, %v238
    %v258 = vmul.f32 %v220, %v242
    %v259 = vmul.f32 %v224, %v230
    %v260 = vmul.f32 %v224, %v234
    %v261 = vmul.f32 %v224, %v238
    %v262 = vmul.f32 %v224, %v242
    %v263 = vadd.f32 %v190, %v247
    %v264 = vadd.f32 %v191, %v248
    %v265 = vadd.f32 %v192, %v249
    %v266 = vadd.f32 %v193, %v250
    %v267 = vadd.f32 %v194, %v251
    %v268 = vadd.f32 %v195, %v252
    %v269 = vadd.f32 %v196, %v253
    %v270 = vadd.f32 %v197, %v254
    %v271 = vadd.f32 %v198, %v255
    %v272 = vadd.f32 %v199, %v256
    %v273 = vadd.f32 %v200, %v257
    %v274 = vadd.f32 %v201, %v258
    %v275 = vadd.f32 %v202, %v259
    %v276 = vadd.f32 %v203, %v260
    %v277 = vadd.f32 %v204, %v261
    %v278 = vadd.f32 %v205, %v262
    %v279 = vmul.f32 %v209, %v209
    %v280 = vadd.f32 %v207, %v279
    %v281 = vtanh.pop %v263
    %v282 = vtanh.pop %v264
    %v283 = vtanh.pop %v265
    %v284 = vtanh.pop %v266
    %v285 = vtanh.pop %v267
    %v286 = vtanh.pop %v268
    %v287 = vtanh.pop %v269
    %v288 = vtanh.pop %v270
    %v289 = vtanh.pop %v271
    %v290 = vtanh.pop %v272
    %v291 = vtanh.pop %v273
    %v292 = vtanh.pop %v274
    %v293 = vtanh.pop %v275
    %v294 = vtanh.pop %v276
    %v295 = vtanh.pop %v277
    %v296 = vtanh.pop %v278
    %v297 = vld [vmem:[%s3] sm:$0xff]
    %v298 = vld [vmem:[%s3 + $0x8] sm:$0xff]
    %v299 = vld [vmem:[%s3 + $0x10] sm:$0xff]
    %v300 = vld [vmem:[%s3 + $0x18] sm:$0xff]
    %v301 = vld [vmem:[%s4] sm:$0xff]
    %v302 = vld [vmem:[%s4 + $0x8] sm:$0xff]
    %v303 = vld [vmem:[%s4 + $0x10] sm:$0xff]
    %v304 = vld [vmem:[%s4 + $0x18] sm:$0xff]
    %306 = vset.pattern.permute.xlu0 0
    %307 = vperm.xlu0 %306, %v301
    %v308 = vpop.permute.xlu0 %307
    %311 = vset.pattern.permute.xlu0 0
    %312 = vperm.xlu0 %311, %v302
    %v313 = vpop.permute.xlu0 %312
    %316 = vset.pattern.permute.xlu0 0
    %317 = vperm.xlu0 %316, %v303
    %v318 = vpop.permute.xlu0 %317
    %321 = vset.pattern.permute.xlu0 0
    %322 = vperm.xlu0 %321, %v304
    %v323 = vpop.permute.xlu0 %322
    %vm325 = vcmask 261120
    %v327 = vsel %vm325, %v297, 0
    %v330 = vsel %vm325, %v298, 0
    %v333 = vsel %vm325, %v299, 0
    %v336 = vsel %vm325, %v300, 0
    %338 = vmatprep.subr.mxu0 0.0
    %339 = vmatpush1.msra.mxu0 0.0
    %340 = vmatprep.subr.mxu0 0.0
    %341 = vmatpush1.msra.mxu0 0.0
    %342 = vmatprep.subr.mxu0 0.0
    %343 = vmatpush1.msra.mxu0 0.0
    %344 = vmatprep.subr.mxu0 0.0
    %345 = vmatpush1.msra.mxu0 0.0
    %346 = vmatprep.subr.mxu0 0.0
    %347 = vmatpush1.msra.mxu0 0.0
    %348 = vmatprep.subr.mxu0 0.0
    %349 = vmatpush1.msra.mxu0 0.0
    %350 = vmatprep.subr.mxu0 0.0
    %351 = vmatpush1.msra.mxu0 0.0
    %352 = vmatprep.subr.mxu0 0.0
    %353 = vmatpush1.msra.mxu0 0.0
    %354 = vmatprep.subr.mxu0 0.0
    %355 = vmatpush1.msra.mxu0 0.0
    %356 = vmatprep.subr.mxu0 0.0
    %357 = vmatpush1.msra.mxu0 0.0
    %358 = vmatprep.subr.mxu0 0.0
    %359 = vmatpush1.msra.mxu0 0.0
    %360 = vmatprep.subr.mxu0 0.0
    %361 = vmatpush1.msra.mxu0 0.0
    %362 = vmatprep.subr.mxu0 %v294
    %363 = vmatpush1.msra.mxu0 %v293
    %364 = vmatprep.subr.mxu0 %v290
    %365 = vmatpush1.msra.mxu0 %v289
    %366 = vmatprep.subr.mxu0 %v286
    %367 = vmatpush1.msra.mxu0 %v285
    %368 = vmatprep.subr.mxu0 %v282
    %369 = vmatpush1.msra.mxu0 %v281
    %370 = vmatprep.subr.mxu0 0.0
    %371 = vmatpush2.msra.mxu0 0.0
    %372 = vmatprep.subr.mxu0 0.0
    %373 = vmatpush2.msra.mxu0 0.0
    %374 = vmatprep.subr.mxu0 0.0
    %375 = vmatpush2.msra.mxu0 0.0
    %376 = vmatprep.subr.mxu0 0.0
    %377 = vmatpush2.msra.mxu0 0.0
    %378 = vmatprep.subr.mxu0 0.0
    %379 = vmatpush2.msra.mxu0 0.0
    %380 = vmatprep.subr.mxu0 0.0
    %381 = vmatpush2.msra.mxu0 0.0
    %382 = vmatprep.subr.mxu0 0.0
    %383 = vmatpush2.msra.mxu0 0.0
    %384 = vmatprep.subr.mxu0 0.0
    %385 = vmatpush2.msra.mxu0 0.0
    %386 = vmatprep.subr.mxu0 0.0
    %387 = vmatpush2.msra.mxu0 0.0
    %388 = vmatprep.subr.mxu0 0.0
    %389 = vmatpush2.msra.mxu0 0.0
    %390 = vmatprep.subr.mxu0 0.0
    %391 = vmatpush2.msra.mxu0 0.0
    %392 = vmatprep.subr.mxu0 0.0
    %393 = vmatpush2.msra.mxu0 0.0
    %394 = vmatprep.subr.mxu0 0.0
    %395 = vmatpush2.msra.mxu0 0.0
    %396 = vmatprep.subr.mxu0 0.0
    %397 = vmatpush2.msra.mxu0 0.0
    %398 = vmatprep.subr.mxu0 0.0
    %399 = vmatpush2.msra.mxu0 0.0
    %400 = vmatprep.subr.mxu0 0.0
    %401 = vmatpush2.msra.mxu0 0.0
    %402 = vmatprep.mubr.f32.mxu0 0.0
    %403 = vmatmul.mubr.f32.gmra.mxu0 %v327
    %v404 = vpop.f32.mrf.mxu0
    %v405 = vadd.f32 %v308, %v404
    %v406 = vpop.f32.mrf.mxu0
    %v407 = vadd.f32 %v308, %v406
    %408 = vmatprep.mubr.f32.mxu0 0.0
    %409 = vmatmul.mubr.f32.gmra.mxu0 %v330
    %v410 = vpop.f32.mrf.mxu0
    %v411 = vadd.f32 %v313, %v410
    %v412 = vpop.f32.mrf.mxu0
    %v413 = vadd.f32 %v313, %v412
    %414 = vmatprep.mubr.f32.mxu0 0.0
    %415 = vmatmul.mubr.f32.gmra.mxu0 %v333
    %v416 = vpop.f32.mrf.mxu0
    %v417 = vadd.f32 %v318, %v416
    %v418 = vpop.f32.mrf.mxu0
    %v419 = vadd.f32 %v318, %v418
    %420 = vmatprep.mubr.f32.mxu0 0.0
    %421 = vmatmul.mubr.f32.gmra.mxu0 %v336
    %v422 = vpop.f32.mrf.mxu0
    %v423 = vadd.f32 %v323, %v422
    %v424 = vpop.f32.mrf.mxu0
    %v425 = vadd.f32 %v323, %v424
    %426 = vdwg.mxu0
    %427 = vmatprep.subr.mxu0 0.0
    %428 = vmatpush1.msra.mxu0 0.0
    %429 = vmatprep.subr.mxu0 0.0
    %430 = vmatpush1.msra.mxu0 0.0
    %431 = vmatprep.subr.mxu0 0.0
    %432 = vmatpush1.msra.mxu0 0.0
    %433 = vmatprep.subr.mxu0 0.0
    %434 = vmatpush1.msra.mxu0 0.0
    %435 = vmatprep.subr.mxu0 0.0
    %436 = vmatpush1.msra.mxu0 0.0
    %437 = vmatprep.subr.mxu0 0.0
    %438 = vmatpush1.msra.mxu0 0.0
    %439 = vmatprep.subr.mxu0 0.0
    %440 = vmatpush1.msra.mxu0 0.0
    %441 = vmatprep.subr.mxu0 0.0
    %442 = vmatpush1.msra.mxu0 0.0
    %443 = vmatprep.subr.mxu0 0.0
    %444 = vmatpush1.msra.mxu0 0.0
    %445 = vmatprep.subr.mxu0 0.0
    %446 = vmatpush1.msra.mxu0 0.0
    %447 = vmatprep.subr.mxu0 0.0
    %448 = vmatpush1.msra.mxu0 0.0
    %449 = vmatprep.subr.mxu0 0.0
    %450 = vmatpush1.msra.mxu0 0.0
    %451 = vmatprep.subr.mxu0 %v296
    %452 = vmatpush1.msra.mxu0 %v295
    %453 = vmatprep.subr.mxu0 %v292
    %454 = vmatpush1.msra.mxu0 %v291
    %455 = vmatprep.subr.mxu0 %v288
    %456 = vmatpush1.msra.mxu0 %v287
    %457 = vmatprep.subr.mxu0 %v284
    %458 = vmatpush1.msra.mxu0 %v283
    %459 = vmatprep.subr.mxu0 0.0
    %460 = vmatpush2.msra.mxu0 0.0
    %461 = vmatprep.subr.mxu0 0.0
    %462 = vmatpush2.msra.mxu0 0.0
    %463 = vmatprep.subr.mxu0 0.0
    %464 = vmatpush2.msra.mxu0 0.0
    %465 = vmatprep.subr.mxu0 0.0
    %466 = vmatpush2.msra.mxu0 0.0
    %467 = vmatprep.subr.mxu0 0.0
    %468 = vmatpush2.msra.mxu0 0.0
    %469 = vmatprep.subr.mxu0 0.0
    %470 = vmatpush2.msra.mxu0 0.0
    %471 = vmatprep.subr.mxu0 0.0
    %472 = vmatpush2.msra.mxu0 0.0
    %473 = vmatprep.subr.mxu0 0.0
    %474 = vmatpush2.msra.mxu0 0.0
    %475 = vmatprep.subr.mxu0 0.0
    %476 = vmatpush2.msra.mxu0 0.0
    %477 = vmatprep.subr.mxu0 0.0
    %478 = vmatpush2.msra.mxu0 0.0
    %479 = vmatprep.subr.mxu0 0.0
    %480 = vmatpush2.msra.mxu0 0.0
    %481 = vmatprep.subr.mxu0 0.0
    %482 = vmatpush2.msra.mxu0 0.0
    %483 = vmatprep.subr.mxu0 0.0
    %484 = vmatpush2.msra.mxu0 0.0
    %485 = vmatprep.subr.mxu0 0.0
    %486 = vmatpush2.msra.mxu0 0.0
    %487 = vmatprep.subr.mxu0 0.0
    %488 = vmatpush2.msra.mxu0 0.0
    %489 = vmatprep.subr.mxu0 0.0
    %490 = vmatpush2.msra.mxu0 0.0
    %491 = vmatprep.mubr.f32.mxu0 0.0
    %492 = vmatmul.mubr.f32.gmra.mxu0 %v327
    %v493 = vpop.f32.mrf.mxu0
    %v494 = vadd.f32 %v308, %v493
    %v495 = vpop.f32.mrf.mxu0
    %v496 = vadd.f32 %v308, %v495
    %497 = vmatprep.mubr.f32.mxu0 0.0
    %498 = vmatmul.mubr.f32.gmra.mxu0 %v330
    %v499 = vpop.f32.mrf.mxu0
    %v500 = vadd.f32 %v313, %v499
    %v501 = vpop.f32.mrf.mxu0
    %v502 = vadd.f32 %v313, %v501
    %503 = vmatprep.mubr.f32.mxu0 0.0
    %504 = vmatmul.mubr.f32.gmra.mxu0 %v333
    %v505 = vpop.f32.mrf.mxu0
    %v506 = vadd.f32 %v318, %v505
    %v507 = vpop.f32.mrf.mxu0
    %v508 = vadd.f32 %v318, %v507
    %509 = vmatprep.mubr.f32.mxu0 0.0
    %510 = vmatmul.mubr.f32.gmra.mxu0 %v336
    %v511 = vpop.f32.mrf.mxu0
    %v512 = vadd.f32 %v323, %v511
    %v513 = vpop.f32.mrf.mxu0
    %v514 = vadd.f32 %v323, %v513
    %515 = vdwg.mxu0
    %v516 = vtanh.pop %v405
    %v517 = vtanh.pop %v407
    %v518 = vtanh.pop %v494
    %v519 = vtanh.pop %v496
    %v520 = vtanh.pop %v411
    %v521 = vtanh.pop %v413
    %v522 = vtanh.pop %v500
    %v523 = vtanh.pop %v502
    %v524 = vtanh.pop %v417
    %v525 = vtanh.pop %v419
    %v526 = vtanh.pop %v506
    %v527 = vtanh.pop %v508
    %v528 = vtanh.pop %v423
    %v529 = vtanh.pop %v425
    %v530 = vtanh.pop %v512
    %v531 = vtanh.pop %v514
    %v532 = vld [vmem:[%s5] sm:$0x1]
    %s533 = sld [smem:[#allocation2]]
    %v534 = vstv %s533
    %v536 = vsel %vm325, %v532, 0
    %538 = vmatprep.subr.mxu0 0.0
    %539 = vmatpush1.msra.mxu0 0.0
    %540 = vmatprep.subr.mxu0 0.0
    %541 = vmatpush1.msra.mxu0 0.0
    %542 = vmatprep.subr.mxu0 0.0
    %543 = vmatpush1.msra.mxu0 0.0
    %544 = vmatprep.subr.mxu0 0.0
    %545 = vmatpush1.msra.mxu0 0.0
    %546 = vmatprep.subr.mxu0 0.0
    %547 = vmatpush1.msra.mxu0 0.0
    %548 = vmatprep.subr.mxu0 0.0
    %549 = vmatpush1.msra.mxu0 0.0
    %550 = vmatprep.subr.mxu0 0.0
    %551 = vmatpush1.msra.mxu0 0.0
    %552 = vmatprep.subr.mxu0 0.0
    %553 = vmatpush1.msra.mxu0 0.0
    %554 = vmatprep.subr.mxu0 0.0
    %555 = vmatpush1.msra.mxu0 0.0
    %556 = vmatprep.subr.mxu0 0.0
    %557 = vmatpush1.msra.mxu0 0.0
    %558 = vmatprep.subr.mxu0 0.0
    %559 = vmatpush1.msra.mxu0 0.0
    %560 = vmatprep.subr.mxu0 0.0
    %561 = vmatpush1.msra.mxu0 0.0
    %562 = vmatprep.subr.mxu0 %v529
    %563 = vmatpush1.msra.mxu0 %v528
    %564 = vmatprep.subr.mxu0 %v525
    %565 = vmatpush1.msra.mxu0 %v524
    %566 = vmatprep.subr.mxu0 %v521
    %567 = vmatpush1.msra.mxu0 %v520
    %568 = vmatprep.subr.mxu0 %v517
    %569 = vmatpush1.msra.mxu0 %v516
    %570 = vmatprep.subr.mxu0 0.0
    %571 = vmatpush2.msra.mxu0 0.0
    %572 = vmatprep.subr.mxu0 0.0
    %573 = vmatpush2.msra.mxu0 0.0
    %574 = vmatprep.subr.mxu0 0.0
    %575 = vmatpush2.msra.mxu0 0.0
    %576 = vmatprep.subr.mxu0 0.0
    %577 = vmatpush2.msra.mxu0 0.0
    %578 = vmatprep.subr.mxu0 0.0
    %579 = vmatpush2.msra.mxu0 0.0
    %580 = vmatprep.subr.mxu0 0.0
    %581 = vmatpush2.msra.mxu0 0.0
    %582 = vmatprep.subr.mxu0 0.0
    %583 = vmatpush2.msra.mxu0 0.0
    %584 = vmatprep.subr.mxu0 0.0
    %585 = vmatpush2.msra.mxu0 0.0
    %586 = vmatprep.subr.mxu0 0.0
    %587 = vmatpush2.msra.mxu0 0.0
    %588 = vmatprep.subr.mxu0 0.0
    %589 = vmatpush2.msra.mxu0 0.0
    %590 = vmatprep.subr.mxu0 0.0
    %591 = vmatpush2.msra.mxu0 0.0
    %592 = vmatprep.subr.mxu0 0.0
    %593 = vmatpush2.msra.mxu0 0.0
    %594 = vmatprep.subr.mxu0 0.0
    %595 = vmatpush2.msra.mxu0 0.0
    %596 = vmatprep.subr.mxu0 0.0
    %597 = vmatpush2.msra.mxu0 0.0
    %598 = vmatprep.subr.mxu0 0.0
    %599 = vmatpush2.msra.mxu0 0.0
    %600 = vmatprep.subr.mxu0 0.0
    %601 = vmatpush2.msra.mxu0 0.0
    %602 = vmatprep.mubr.f32.mxu0 0.0
    %603 = vmatmul.mubr.f32.gmra.mxu0 %v536
    %v604 = vpop.f32.mrf.mxu0
    %v605 = vadd.f32 %v534, %v604
    %v606 = vpop.f32.mrf.mxu0
    %v607 = vadd.f32 %v534, %v606
    %608 = vdwg.mxu0
    %609 = vmatprep.subr.mxu0 0.0
    %610 = vmatpush1.msra.mxu0 0.0
    %611 = vmatprep.subr.mxu0 0.0
    %612 = vmatpush1.msra.mxu0 0.0
    %613 = vmatprep.subr.mxu0 0.0
    %614 = vmatpush1.msra.mxu0 0.0
    %615 = vmatprep.subr.mxu0 0.0
    %616 = vmatpush1.msra.mxu0 0.0
    %617 = vmatprep.subr.mxu0 0.0
    %618 = vmatpush1.msra.mxu0 0.0
    %619 = vmatprep.subr.mxu0 0.0
    %620 = vmatpush1.msra.mxu0 0.0
    %621 = vmatprep.subr.mxu0 0.0
    %622 = vmatpush1.msra.mxu0 0.0
    %623 = vmatprep.subr.mxu0 0.0
    %624 = vmatpush1.msra.mxu0 0.0
    %625 = vmatprep.subr.mxu0 0.0
    %626 = vmatpush1.msra.mxu0 0.0
    %627 = vmatprep.subr.mxu0 0.0
    %628 = vmatpush1.msra.mxu0 0.0
    %629 = vmatprep.subr.mxu0 0.0
    %630 = vmatpush1.msra.mxu0 0.0
    %631 = vmatprep.subr.mxu0 0.0
    %632 = vmatpush1.msra.mxu0 0.0
    %633 = vmatprep.subr.mxu0 %v531
    %634 = vmatpush1.msra.mxu0 %v530
    %635 = vmatprep.subr.mxu0 %v527
    %636 = vmatpush1.msra.mxu0 %v526
    %637 = vmatprep.subr.mxu0 %v523
    %638 = vmatpush1.msra.mxu0 %v522
    %639 = vmatprep.subr.mxu0 %v519
    %640 = vmatpush1.msra.mxu0 %v518
    %641 = vmatprep.subr.mxu0 0.0
    %642 = vmatpush2.msra.mxu0 0.0
    %643 = vmatprep.subr.mxu0 0.0
    %644 = vmatpush2.msra.mxu0 0.0
    %645 = vmatprep.subr.mxu0 0.0
    %646 = vmatpush2.msra.mxu0 0.0
    %647 = vmatprep.subr.mxu0 0.0
    %648 = vmatpush2.msra.mxu0 0.0
    %649 = vmatprep.subr.mxu0 0.0
    %650 = vmatpush2.msra.mxu0 0.0
    %651 = vmatprep.subr.mxu0 0.0
    %652 = vmatpush2.msra.mxu0 0.0
    %653 = vmatprep.subr.mxu0 0.0
    %654 = vmatpush2.msra.mxu0 0.0
    %655 = vmatprep.subr.mxu0 0.0
    %656 = vmatpush2.msra.mxu0 0.0
    %657 = vmatprep.subr.mxu0 0.0
    %658 = vmatpush2.msra.mxu0 0.0
    %659 = vmatprep.subr.mxu0 0.0
    %660 = vmatpush2.msra.mxu0 0.0
    %661 = vmatprep.subr.mxu0 0.0
    %662 = vmatpush2.msra.mxu0 0.0
    %663 = vmatprep.subr.mxu0 0.0
    %664 = vmatpush2.msra.mxu0 0.0
    %665 = vmatprep.subr.mxu0 0.0
    %666 = vmatpush2.msra.mxu0 0.0
    %667 = vmatprep.subr.mxu0 0.0
    %668 = vmatpush2.msra.mxu0 0.0
    %669 = vmatprep.subr.mxu0 0.0
    %670 = vmatpush2.msra.mxu0 0.0
    %671 = vmatprep.subr.mxu0 0.0
    %672 = vmatpush2.msra.mxu0 0.0
    %673 = vmatprep.mubr.f32.mxu0 0.0
    %674 = vmatmul.mubr.f32.gmra.mxu0 %v536
    %v675 = vpop.f32.mrf.mxu0
    %v676 = vadd.f32 %v534, %v675
    %v677 = vpop.f32.mrf.mxu0
    %v678 = vadd.f32 %v534, %v677
    %679 = vdwg.mxu0
    %v680 = vmul.f32 %v605, 0.5
    %v681 = vmul.f32 %v607, 0.5
    %v682 = vmul.f32 %v676, 0.5
    %v683 = vmul.f32 %v678, 0.5
    %v684 = vlog2.pop %v280
    %v685 = vmul.f32 %v684, 0.6931472
    %v687 = vlaneseq
    %v688 = vshrl.u32 %v687, 7
    %v689 = vsub.s32 0, %v688
    %v690 = vrot.slane %v685, %v689
    %v691 = vlaneseq
    %v692 = vshrl.u32 %v691, 7
    %v693 = vsub.s32 1, %v692
    %v694 = vrot.slane %v685, %v693
    %v695 = vlaneseq
    %v696 = vshrl.u32 %v695, 7
    %v697 = vsub.s32 2, %v696
    %v698 = vrot.slane %v685, %v697
    %v699 = vlaneseq
    %v700 = vshrl.u32 %v699, 7
    %v701 = vsub.s32 3, %v700
    %v702 = vrot.slane %v685, %v701
    %v707 = vmul.f32 %v680, %v690
    %v708 = vmul.f32 %v681, %v694
    %v709 = vmul.f32 %v682, %v698
    %v710 = vmul.f32 %v683, %v702
    %v711 = vmul.f32 %v707, 1.442695
    %v712 = vpow.pop %v711
    %v713 = vmul.f32 %v708, 1.442695
    %v714 = vpow.pop %v713
    %v715 = vmul.f32 %v709, 1.442695
    %v716 = vpow.pop %v715
    %v717 = vmul.f32 %v710, 1.442695
    %v718 = vpow.pop %v717
    %vm719 = vcmp.gt.f32.partialorder %v605, 0.0
    %vm720 = vcmp.gt.f32.partialorder %v607, 0.0
    %vm721 = vcmp.gt.f32.partialorder %v676, 0.0
    %vm722 = vcmp.gt.f32.partialorder %v678, 0.0
    %vm723 = vcmp.eq.f32.partialorder %v605, 0.0
    %vm724 = vcmp.eq.f32.partialorder %v607, 0.0
    %vm725 = vcmp.eq.f32.partialorder %v676, 0.0
    %vm726 = vcmp.eq.f32.partialorder %v678, 0.0
    %v727 = vsel %vm723, 1.0, inf
    %v728 = vsel %vm724, 1.0, inf
    %v729 = vsel %vm725, 1.0, inf
    %v730 = vsel %vm726, 1.0, inf
    %v731 = vsel %vm719, 0.0, %v727
    %v732 = vsel %vm720, 0.0, %v728
    %v733 = vsel %vm721, 0.0, %v729
    %v734 = vsel %vm722, 0.0, %v730
    %vm735 = vcmp.gt.f32.partialorder %v280, 0.0
    %v740 = vcombine.low %v712, %v714
    %v741 = vcombine.low %v716, %v718
    %v743 = vunpack.c.l.s4 1966171168
    %v744 = vunpack.c.0.s8 %v743
    %v745 = vlaneseq
    %v746 = vshrl.u32 %v745, 7
    %v747 = vsub.s32 %v744, %v746
    %v748 = vrot.slane %v740, %v747
    %v750 = vunpack.c.l.s4 1966171168
    %v751 = vunpack.c.0.s8 %v750
    %v752 = vlaneseq
    %v753 = vshrl.u32 %v752, 7
    %v754 = vsub.s32 %v751, %v753
    %v755 = vrot.slane %v741, %v754
    %v756 = vcombine.low %v748, %v755
    %v758 = vunpack.c.l.s4 1966171168
    %v759 = vunpack.c.0.s8 %v758
    %v760 = vlaneseq
    %v761 = vshrl.u32 %v760, 7
    %v762 = vsub.s32 %v759, %v761
    %v763 = vrot.slane %v756, %v762
    %v769 = vcombine.low %v731, %v732
    %v770 = vcombine.low %v733, %v734
    %v772 = vunpack.c.l.s4 1966171168
    %v773 = vunpack.c.0.s8 %v772
    %v774 = vlaneseq
    %v775 = vshrl.u32 %v774, 7
    %v776 = vsub.s32 %v773, %v775
    %v777 = vrot.slane %v769, %v776
    %v779 = vunpack.c.l.s4 1966171168
    %v780 = vunpack.c.0.s8 %v779
    %v781 = vlaneseq
    %v782 = vshrl.u32 %v781, 7
    %v783 = vsub.s32 %v780, %v782
    %v784 = vrot.slane %v770, %v783
    %v785 = vcombine.low %v777, %v784
    %v787 = vunpack.c.l.s4 1966171168
    %v788 = vunpack.c.0.s8 %v787
    %v789 = vlaneseq
    %v790 = vshrl.u32 %v789, 7
    %v791 = vsub.s32 %v788, %v790
    %v792 = vrot.slane %v785, %v791
    %v794 = vsel %vm735, %v763, %v792
    %s795 = sld [smem:[#allocation3]]
    %v796 = vstv %s795
    %v797 = vmul.f32 %v794, %v796
    %v798 = vlaneseq
    %vm799 = vcmp.ge.s32.totalorder %v798, 0
    %vm800 = vcmp.lt.s32.totalorder %v798, 512
    %vm801 = vmand %vm799, %vm800
    %802 = vst.msk [vmem:[#allocation4] sm:$0xf] %vm801, %v797
    // Predicated region
    $region34: #{neural_net_forward.1} parent=1 // pred_check
      _
    $region35: #{neural_net_forward.1} parent=1 // pred_check_branch
      %804 = sbr.rel (0) target = $region37
    $region36: #{neural_net_forward.1} parent=1 // pred_region
      %s806 = ssub.s32 64, 64
      %807 = vsyncadd [#allocation5], %s806
      %s809 = sshll.u32 [#allocation4], 4
      %s810 = int_to_ptr.vmem [resolvable:$true] %s809
      %812 = dma.vmem_to_hbm [thread:$0]  %s810, 64, %s8, [#allocation5]
    $region37: #{neural_net_forward.1} parent=1 // pred_fallthru
      _
    // Predicated region
    $region38: #{neural_net_forward.1} parent=1 // pred_check
      _
    $region39: #{neural_net_forward.1} parent=1 // pred_check_branch
      %814 = sbr.rel (0) target = $region41
    $region40: #{neural_net_forward.1} parent=1 // pred_region
      %815 = dma.done [#allocation5], 64
    $region41: #{neural_net_forward.1} parent=1 // pred_fallthru
      _
    %816 = vsyncpa [#allocation5], 1

</llo_original>
